<compile_context>
chip_gen: v6e
topology: v6e:2x2x1
jax: 0.10.0
libtpu: 0.0.40
codegen_flags: <defaults>
</compile_context>

<pallas_src>
import functools

import jax
import jax.numpy as jnp
from jax.experimental import pallas as pl
from jax.experimental.pallas import tpu as pltpu

_PAIRWISE_EPS = 1e-6   # torch.nn.functional.pairwise_distance default eps
_COSINE_EPS = 1e-8     # torch.nn.functional.cosine_similarity default eps


def _vmem_capacity_bytes() -> int:
    """Physical VMEM of the local TPU; conservative (v7x) fallback."""
    try:
        info = pltpu.get_tpu_info()
        cap = getattr(info, "vmem_capacity_bytes", None)
        if cap:
            return int(cap)
    except Exception:
        pass
    return 64 << 20


def _contrastive_loss_kernel(x1_ref, x2_ref, label_ref, out_ref, *,
                             margin: float, metric: str, batch: int,
                             tile_rows: int):
    i = pl.program_id(0)

    # Native (rows, features) layout; upcast happens on-chip.
    # TODO(synk): for bf16 inputs on bf16-VALU parts (v6e/v7x) the diff/abs
    # could stay in bf16 with f32 accumulation; skipped since the kernel is
    # HBM-bandwidth bound and f32 temps are already budgeted for.
    x1 = x1_ref[...].astype(jnp.float32)        # (TB, D)
    x2 = x2_ref[...].astype(jnp.float32)        # (TB, D)
    lbl = label_ref[...].astype(jnp.float32)    # (TB, 1)

    if metric == "euclidean":
        diff = x1 - x2 + _PAIRWISE_EPS
        dist = jnp.sqrt(jnp.sum(diff * diff, axis=-1, keepdims=True))   # (TB,1)
    elif metric == "manhattan":
        diff = x1 - x2 + _PAIRWISE_EPS
        dist = jnp.sum(jnp.abs(diff), axis=-1, keepdims=True)           # (TB,1)
    elif metric == "cosine":
        dot = jnp.sum(x1 * x2, axis=-1, keepdims=True)
        s1 = jnp.sum(x1 * x1, axis=-1, keepdims=True)
        s2 = jnp.sum(x2 * x2, axis=-1, keepdims=True)
        eps2 = jnp.float32(_COSINE_EPS * _COSINE_EPS)
        # single rsqrt (EUP slot) instead of two sqrts + a divide
        dist = 1.0 - dot * jax.lax.rsqrt(jnp.maximum(s1 * s2, eps2))    # (TB,1)
    else:
        raise ValueError(f"Unknown distance metric: {metric}")

    pos = (1.0 - lbl) * dist * dist
    hinge = jnp.maximum(margin - dist, 0.0)
    neg = lbl * hinge * hinge
    per = pos + neg                                                     # (TB,1)

    # Ragged-tail mask: only emitted when a partial final tile exists
    # (static Python condition).  Must remain a true select so NaN/Inf from
    # uninitialized padded rows never propagates.
    if batch % tile_rows != 0:
        row = jax.lax.broadcasted_iota(jnp.int32, per.shape, 0)
        valid = (i * tile_rows + row) < batch
        per = jnp.where(valid, per, 0.0)

    partial = jnp.sum(per)                              # scalar partial sum
    out_ref[...] = jnp.broadcast_to(partial, out_ref.shape)


def _pick_tile_rows(batch: int, dim: int, itemsize: int) -> int:
    """Largest row-tile (multiple of 8, or the whole batch) whose
    double-buffered native inputs PLUS ~4 f32 block temporaries fit a
    generation-aware VMEM budget."""
    cap = _vmem_capacity_bytes()
    budget = min(cap // 3, 40 << 20)          # ~21 MiB on v7x, 40 MiB on v5e/v6e
    per_row = 4 * dim * itemsize + 16 * dim   # 2 inputs x 2 bufs + 4 f32 temps
    max_rows = budget // max(per_row, 1)
    max_rows = max(8, (max_rows // 8) * 8)
    if batch <= max_rows:
        return batch                          # single whole-batch tile
    return int(max_rows)


def contrastive_loss(output1, output2, label, *,
                     margin: float = 1.0,
                     distance_metric: str = "euclidean",
                     tile_rows: int | None = None):
    if distance_metric not in ("euclidean", "manhattan", "cosine"):
        raise ValueError(
            f"Unknown distance metric for ContrastiveLoss: {distance_metric}")
    B, D = output1.shape
    itemsize = jnp.dtype(output1.dtype).itemsize

    if tile_rows is None:
        TB = _pick_tile_rows(B, D, itemsize)
    else:
        TB = min(B, max(8, (int(tile_rows) // 8) * 8))
    num_tiles = -(-B // TB)

    label2d = label.reshape(B, 1).astype(jnp.float32)

    # VMEM limit sized from the real working set (native input double-buffers
    # + f32 temporaries + output/label buffers), capped at 3/4 of physical
    # VMEM (48 MiB on v7x, 96 MiB on v5e/v6e).
    cap = _vmem_capacity_bytes()
    working = (4 * TB * D * itemsize   # 2 inputs x 2 pipeline buffers
               + 4 * TB * D * 4        # ~4 f32 block temporaries
               + 4 * TB * 4            # label buffers + per-row columns
               + 2 * 128 * 4           # output double buffer
               + (1 << 20))            # Pallas-internal slack
    vmem_limit = int(min(max(working + (8 << 20), 32 << 20), (cap * 3) // 4))

    flops = 6 * B * D + 12 * B
    transcendentals = {"euclidean": B, "manhattan": 0, "cosine": B}[
        distance_metric]
    bytes_accessed = 2 * B * D * itemsize + B * 4 + num_tiles * 128 * 4

    kernel = functools.partial(
        _contrastive_loss_kernel, margin=float(margin),
        metric=distance_metric, batch=B, tile_rows=TB)

    partials = pl.pallas_call(
        kernel,
        out_shape=jax.ShapeDtypeStruct((num_tiles, 1, 128), jnp.float32),
        grid=(num_tiles,),
        in_specs=[
            pl.BlockSpec((TB, D), lambda i: (i, 0)),
            pl.BlockSpec((TB, D), lambda i: (i, 0)),
            pl.BlockSpec((TB, 1), lambda i: (i, 0)),
        ],
        out_specs=pl.BlockSpec((1, 1, 128), lambda i: (i, 0, 0)),
        compiler_params=pltpu.CompilerParams(
            dimension_semantics=("parallel",),
            vmem_limit_bytes=vmem_limit),
        cost_estimate=pl.CostEstimate(
            flops=flops,
            transcendentals=transcendentals,
            bytes_accessed=bytes_accessed),
    )(output1, output2, label2d)

    # Tiny cross-tile reduction in the wrapper (num_tiles scalars).
    return jnp.sum(partials[:, 0, 0]) * jnp.float32(1.0 / B)


def _reference_loss(x1, x2, label, margin=1.0, metric="euclidean"):
    x1 = x1.astype(jnp.float32)
    x2 = x2.astype(jnp.float32)
    label = label.astype(jnp.float32)
    if metric == "euclidean":
        d = x1 - x2 + _PAIRWISE_EPS
        dist = jnp.sqrt(jnp.sum(d * d, axis=-1))
    elif metric == "manhattan":
        dist = jnp.sum(jnp.abs(x1 - x2 + _PAIRWISE_EPS), axis=-1)
    else:
        w12 = jnp.sum(x1 * x2, axis=-1)
        w1 = jnp.sum(x1 * x1, axis=-1)
        w2 = jnp.sum(x2 * x2, axis=-1)
        dist = 1.0 - w12 / jnp.sqrt(jnp.maximum(w1 * w2,
                                                _COSINE_EPS * _COSINE_EPS))
    return jnp.mean((1.0 - label) * dist ** 2
                    + label * jnp.maximum(margin - dist, 0.0) ** 2)


if __name__ == "__main__":
    key = jax.random.PRNGKey(0)
    k1, k2, k3, k4, k5, k6 = jax.random.split(key, 6)

    ok = True

    # Small shapes implied by the siamese module: a batch of embedding pairs.
    B, D = 8, 32
    output1 = jax.random.normal(k1, (B, D), dtype=jnp.float32)
    output2 = jax.random.normal(k2, (B, D), dtype=jnp.float32)
    label = jax.random.bernoulli(k3, 0.5, (B,)).astype(jnp.float32)

    for metric in ("euclidean", "manhattan", "cosine"):
        loss = contrastive_loss(output1, output2, label,
                                margin=1.0, distance_metric=metric)
        loss = jax.block_until_ready(loss)
        ref = _reference_loss(output1, output2, label, 1.0, metric)
        if not jnp.allclose(loss, ref, rtol=1e-5, atol=1e-5):
            ok = False

    # Exercise the multi-tile parallel pipeline + ragged-tail masking path.
    B2, D2 = 300, 64
    o1 = jax.random.normal(k4, (B2, D2), dtype=jnp.float32)
    o2 = jax.random.normal(k5, (B2, D2), dtype=jnp.float32)
    lb = jax.random.bernoulli(k6, 0.5, (B2,)).astype(jnp.float32)
    for metric in ("euclidean", "manhattan", "cosine"):
        loss = contrastive_loss(o1, o2, lb, margin=1.0,
                                distance_metric=metric, tile_rows=128)
        loss = jax.block_until_ready(loss)
        ref = _reference_loss(o1, o2, lb, 1.0, metric)
        if not jnp.allclose(loss, ref, rtol=1e-5, atol=1e-5):
            ok = False

    if ok:
        print("KERNEL_OK")
    else:
        print("KERNEL_MISMATCH")
</pallas_src>

<mosaic_0001>
module attributes {stable_mosaic.version = 11 : i64} {
  func.func @_contrastive_loss_kernel(%arg0: i32, %arg1: memref<8x32xf32, #tpu.memory_space<vmem>>, %arg2: memref<8x32xf32, #tpu.memory_space<vmem>>, %arg3: memref<8x1xf32, #tpu.memory_space<vmem>>, %arg4: memref<1x1x128xf32, #tpu.memory_space<vmem>>) attributes {dimension_semantics = [#tpu.dimension_semantics<parallel>], iteration_bounds = array<i64: 1>, scalar_prefetch = 0 : i64, scratch_operands = 0 : i64, tpu.core_type = #tpu.core_type<tc>, window_params = [{transform_indices = @transform_0, window_bounds = array<i64: 8, 32>}, {transform_indices = @transform_1, window_bounds = array<i64: 8, 32>}, {transform_indices = @transform_2, window_bounds = array<i64: 8, 1>}, {transform_indices = @transform_3, window_bounds = array<i64: 1, 1, 128>}]} {
    %c0 = arith.constant 0 : index
    %c0_0 = arith.constant 0 : index
    %0 = vector.load %arg1[%c0, %c0_0] : memref<8x32xf32, #tpu.memory_space<vmem>>, vector<8x32xf32>
    %c0_1 = arith.constant 0 : index
    %c0_2 = arith.constant 0 : index
    %1 = vector.load %arg2[%c0_1, %c0_2] : memref<8x32xf32, #tpu.memory_space<vmem>>, vector<8x32xf32>
    %c0_3 = arith.constant 0 : index
    %c0_4 = arith.constant 0 : index
    %2 = vector.load %arg3[%c0_3, %c0_4] : memref<8x1xf32, #tpu.memory_space<vmem>>, vector<8x1xf32>
    %3 = arith.subf %0, %1 : vector<8x32xf32>
    %cst = arith.constant 9.99999997E-7 : f32
    %4 = vector.broadcast %cst : f32 to vector<8x32xf32>
    %5 = arith.addf %3, %4 : vector<8x32xf32>
    %6 = arith.mulf %5, %5 : vector<8x32xf32>
    %cst_5 = arith.constant dense<0.000000e+00> : vector<8xf32>
    %7 = vector.multi_reduction <add>, %6, %cst_5 [1] : vector<8x32xf32> to vector<8xf32>
    %8 = vector.shape_cast %7 : vector<8xf32> to vector<8x1xf32>
    %9 = math.sqrt %8 : vector<8x1xf32>
    %cst_6 = arith.constant 1.000000e+00 : f32
    %10 = vector.broadcast %cst_6 : f32 to vector<8x1xf32>
    %11 = arith.subf %10, %2 : vector<8x1xf32>
    %12 = arith.mulf %11, %9 : vector<8x1xf32>
    %13 = arith.mulf %12, %9 : vector<8x1xf32>
    %cst_7 = arith.constant 1.000000e+00 : f32
    %14 = vector.broadcast %cst_7 : f32 to vector<8x1xf32>
    %15 = arith.subf %14, %9 : vector<8x1xf32>
    %cst_8 = arith.constant 0.000000e+00 : f32
    %16 = vector.broadcast %cst_8 : f32 to vector<8x1xf32>
    %17 = arith.maximumf %15, %16 : vector<8x1xf32>
    %18 = arith.mulf %2, %17 : vector<8x1xf32>
    %19 = arith.mulf %18, %17 : vector<8x1xf32>
    %20 = arith.addf %13, %19 : vector<8x1xf32>
    %21 = vector.shape_cast %20 : vector<8x1xf32> to vector<1x8x1xf32>
    %cst_9 = arith.constant dense<0.000000e+00> : vector<1xf32>
    %22 = vector.multi_reduction <add>, %21, %cst_9 [1, 2] : vector<1x8x1xf32> to vector<1xf32>
    %23 = vector.shape_cast %22 : vector<1xf32> to vector<1x1x1xf32>
    %24 = vector.extract %23[0, 0, 0] : f32 from vector<1x1x1xf32>
    %25 = vector.broadcast %24 : f32 to vector<1x1x128xf32>
    %c0_10 = arith.constant 0 : index
    %c0_11 = arith.constant 0 : index
    %c0_12 = arith.constant 0 : index
    %26 = vector.load %arg4[%c0_10, %c0_11, %c0_12] : memref<1x1x128xf32, #tpu.memory_space<vmem>>, vector<1x1x128xf32>
    tpu.vector_store %arg4[%c0_10, %c0_11, %c0_12], %25 {strides = array<i32>} : memref<1x1x128xf32, #tpu.memory_space<vmem>>, vector<1x1x128xf32>,
    return
  }
  func.func @transform_0(%arg0: i32) -> (i32, i32) {
    %c0_i32 = arith.constant 0 : i32
    %c0_i32_0 = arith.constant 0 : i32
    return %arg0, %c0_i32 : i32, i32
  }
  func.func @transform_1(%arg0: i32) -> (i32, i32) {
    %c0_i32 = arith.constant 0 : i32
    %c0_i32_0 = arith.constant 0 : i32
    return %arg0, %c0_i32 : i32, i32
  }
  func.func @transform_2(%arg0: i32) -> (i32, i32) {
    %c0_i32 = arith.constant 0 : i32
    %c0_i32_0 = arith.constant 0 : i32
    return %arg0, %c0_i32 : i32, i32
  }
  func.func @transform_3(%arg0: i32) -> (i32, i32, i32) {
    %c0_i32 = arith.constant 0 : i32
    %c0_i32_0 = arith.constant 0 : i32
    %c0_i32_1 = arith.constant 0 : i32
    return %arg0, %c0_i32, %c0_i32_0 : i32, i32, i32
  }
}

</mosaic_0001>

<llo_original>
// kernel: tpu_custom_call.1
$region0: #{tpu_custom_call.1}
  #allocation0 [shape = 'u32[]', space=smem, size = 0x4, offset = 0x4, fixed_abs, tag = 'smem constant byte address 0x4 - core index']
  #allocation1 [shape = 'u32[144,128]{1,0:T(1,128)}', space=vmem, size = 0x12000, scoped, tag = 'internal scratch']
  %s0 = inlined_call_operand.vmem [shape: f32[8,32], index: 0, kind: input, shape index: {}]
  %s1 = inlined_call_operand.hbm [shape: f32[8,32], index: 1, kind: input, shape index: {}]
  %s2 = inlined_call_operand.vmem [shape: f32[8,1], index: 2, kind: input, shape index: {}]
  %s3 = inlined_call_operand.hbm [shape: f32[1,1,128], index: 3, kind: output, shape index: {}]
  %s4 = sld [smem:[#allocation0]]
  $region26: #{tpu_custom_call.1} parent=0
    _
  %s6 = ssub.s32 1, %s4
  %s7 = scalar_select 0, %s6, %s4
  $region1: #{tpu_custom_call.1} parent=0
    #allocation2 [shape = 'u8[4096]{0}', space=vmem, size = 0x1000, scoped, tag = 'input window, operand 1, single buffered']
    #allocation3 [shape = 's32[1]{0}', space=sflag, size = 0x4, scoped, tag = 'scoped memory for tpu_custom_call.1']
    #allocation4 [shape = 's32[1]{0}', space=sflag, size = 0x4, scoped, tag = 'scoped memory for tpu_custom_call.1']
    #allocation5 [shape = 'u8[512]{0}', space=vmem, size = 0x400, scoped, tag = 'output window, operand 0, single buffered']
    %8 = vsyncpa [#allocation3], 0
    %9 = vsyncpa [#allocation4], 0
    // Predicated region
    $region2: #{tpu_custom_call.1} parent=1 // pred_check
      _
    $region3: #{tpu_custom_call.1} parent=1 // pred_check_branch
      %11 = sbr.rel (0) target = $region5
    $region4: #{tpu_custom_call.1} parent=1 // pred_region
      _
    $region5: #{tpu_custom_call.1} parent=1 // pred_fallthru
      _
    // Predicated region
    $region6: #{tpu_custom_call.1} parent=1 // pred_check
      _
    $region7: #{tpu_custom_call.1} parent=1 // pred_check_branch
      %13 = sbr.rel (0) target = $region9
    $region8: #{tpu_custom_call.1} parent=1 // pred_region
      %s15 = ssub.s32 128, 128
      %16 = vsyncadd [#allocation3], %s15
      %s18 = sshll.u32 [#allocation2], 4
      %s19 = int_to_ptr.vmem [resolvable:$true] %s18
      %21 = dma.hbm_to_vmem [thread:$0]  %s1, 128, %s19, [#allocation3]
    $region9: #{tpu_custom_call.1} parent=1 // pred_fallthru
      _
    // Predicated region
    $region10: #{tpu_custom_call.1} parent=1 // pred_check
      _
    $region11: #{tpu_custom_call.1} parent=1 // pred_check_branch
      %23 = sbr.rel (0) target = $region13
    $region12: #{tpu_custom_call.1} parent=1 // pred_region
      _
    $region13: #{tpu_custom_call.1} parent=1 // pred_fallthru
      _
    // Predicated region
    $region14: #{tpu_custom_call.1} parent=1 // pred_check
      _
    $region15: #{tpu_custom_call.1} parent=1 // pred_check_branch
      %25 = sbr.rel (0) target = $region17
    $region16: #{tpu_custom_call.1} parent=1 // pred_region
      %26 = dma.done [#allocation3], 128
    $region17: #{tpu_custom_call.1} parent=1 // pred_fallthru
      _
    %v27 = vld [vmem:[%s0] sm:$0xff]
    %v28 = vld [vmem:[#allocation2] sm:$0xff]
    %v29 = vld [vmem:[%s2] sm:$0xff]
    %v30 = vsub.f32 %v27, %v28
    %v31 = vadd.f32 %v30, 1e-06
    %v32 = vmul.f32 %v31, %v31
    %vm33 = vcmask 261120
    %v34 = vsel %vm33, %v32, 0.0
    %35 = vadd.xlane.f32.xlu0 %v34
    %v36 = vpop.xlane.xlu0 %35
    %v37 = vrsqrt.pop %v36
    %v38 = vmul.f32 %v36, %v37
    %vm39 = vcmp.eq.f32.partialorder %v36, inf
    %v40 = vsel %vm39, %v36, %v38
    %vm41 = vcmp.eq.f32.partialorder %v36, 0.0
    %v42 = vand.u32 %v36, 2147483648
    %v43 = vsel %vm41, %v42, %v40
    %v44 = vsub.f32 1.0, %v29
    %v45 = vmul.f32 %v44, %v43
    %v46 = vmul.f32 %v45, %v43
    %v47 = vsub.f32 1.0, %v43
    %v48 = vmax.f32 %v47, 0.0
    %v49 = vmul.f32 %v29, %v48
    %v50 = vmul.f32 %v49, %v48
    %v51 = vadd.f32 %v46, %v50
    %vm52 = vcmask 7168
    %v53 = vsel %vm52, %v51, 0.0
    %54 = vadd.xlane.f32.xlu0 %v53
    %v55 = vpop.xlane.xlu0 %54
    %v56 = vrot.slane %v55, 4
    %v57 = vadd.f32 %v55, %v56
    %v58 = vrot.slane %v57, 2
    %v59 = vadd.f32 %v57, %v58
    %v60 = vrot.slane %v59, 1
    %v61 = vadd.f32 %v59, %v60
    %s62 = vtos %v61
    %v63 = vstv %s62
    %64 = vst [vmem:[#allocation5] sm:$0x1] %v63
    // Predicated region
    $region18: #{tpu_custom_call.1} parent=1 // pred_check
      _
    $region19: #{tpu_custom_call.1} parent=1 // pred_check_branch
      %66 = sbr.rel (0) target = $region21
    $region20: #{tpu_custom_call.1} parent=1 // pred_region
      %s68 = ssub.s32 16, 16
      %69 = vsyncadd [#allocation4], %s68
      %s71 = sshll.u32 [#allocation5], 4
      %s72 = int_to_ptr.vmem [resolvable:$true] %s71
      %74 = dma.vmem_to_hbm [thread:$0]  %s72, 16, %s3, [#allocation4]
    $region21: #{tpu_custom_call.1} parent=1 // pred_fallthru
      _
    // Predicated region
    $region22: #{tpu_custom_call.1} parent=1 // pred_check
      _
    $region23: #{tpu_custom_call.1} parent=1 // pred_check_branch
      %76 = sbr.rel (0) target = $region25
    $region24: #{tpu_custom_call.1} parent=1 // pred_region
      %77 = dma.done [#allocation4], 16
    $region25: #{tpu_custom_call.1} parent=1 // pred_fallthru
      _
    %78 = vsyncpa [#allocation3], 1
    %79 = vsyncpa [#allocation4], 1

</llo_original>
